<compile_context>
chip_gen: v7x
topology: tpu7x:2x2x1
jax: 0.10.0
libtpu: 0.0.40
codegen_flags: <defaults>
</compile_context>

<pallas_src>
import functools

import numpy as np

import jax
import jax.numpy as jnp
from jax import lax
from jax.experimental import pallas as pl
from jax.experimental.pallas import tpu as pltpu


_NEG_BIG = -1e30  # bias padding value for padded vocab columns (exp() underflows to 0)


# --------------------------------------------------------------------------------------
# helpers
# --------------------------------------------------------------------------------------
def _round_up(x, m):
    return ((x + m - 1) // m) * m


def _sublane_pack(dtype):
    # sublane packing: f32 -> 8, bf16 -> 16, int8/fp8 -> 32
    return {2: 16, 1: 32}.get(np.dtype(dtype).itemsize, 8)


@functools.lru_cache(maxsize=1)
def _tpu_vmem_bytes():
    try:
        cap = int(pltpu.get_tpu_info().vmem_capacity_bytes)
        if cap > 0:
            return cap
    except Exception:
        pass
    return 64 * 1024 * 1024  # conservative: v7x per-TensorCore VMEM


def _vmem_limit(est_bytes):
    cap = max(32 * 1024 * 1024, int(0.9 * _tpu_vmem_bytes()))
    want = max(32 * 1024 * 1024, int(est_bytes * 1.3) + (2 << 20))
    return int(min(cap, want, 128 * 1024 * 1024))


def _norm_tile_v(V_pad, tile_v, tile_n, obytes, budget=None):
    # Pass-2 (normalize) tile along V: the largest multiple of tile_v that divides
    # V_pad and keeps double-buffered in/out tiles within a VMEM budget.
    if budget is None:
        budget = min(24 << 20, int(0.5 * _tpu_vmem_bytes()))
    k = V_pad // tile_v
    for cand_k in range(k, 0, -1):
        if k % cand_k != 0:
            continue
        cand = tile_v * cand_k
        need = 2 * tile_n * cand * (4 + obytes) + 4 * tile_n * 4
        if need <= budget:
            return cand
    return tile_v


# --------------------------------------------------------------------------------------
# kernels
# --------------------------------------------------------------------------------------
def _fused_decoder_kernel(x_ref, w_ref, b_ref, o_ref):
    # x_ref: (tile_n, H)  w_ref: (V, H)  b_ref: (1, V)  o_ref: (tile_n, V)
    logits = lax.dot_general(
        x_ref[...], w_ref[...],
        dimension_numbers=(((1,), (1,)), ((), ())),     # contract H of both (W kept (V,H))
        preferred_element_type=jnp.float32,
    ) + b_ref[...]
    m = jnp.max(logits, axis=-1, keepdims=True)
    z = logits - m
    lse = jnp.log(jnp.sum(jnp.exp(z), axis=-1, keepdims=True))
    o_ref[...] = (z - lse).astype(o_ref.dtype)


def _logits_stats_kernel(x_ref, w_ref, b_ref, logits_ref, lse_ref, m_sc, l_sc):
    # grid = (N tiles [parallel], V tiles [arbitrary])
    # x_ref: (tile_n, H)  w_ref: (tile_v, H)  b_ref: (1, tile_v)
    # logits_ref: (tile_n, tile_v) f32 out   lse_ref: (tile_n, 1) f32 out
    v = pl.program_id(1)

    @pl.when(v == 0)
    def _():
        m_sc[...] = jnp.full_like(m_sc[...], -jnp.inf)
        l_sc[...] = jnp.zeros_like(l_sc[...])

    logits = lax.dot_general(
        x_ref[...], w_ref[...],
        dimension_numbers=(((1,), (1,)), ((), ())),
        preferred_element_type=jnp.float32,
    ) + b_ref[...]
    logits_ref[...] = logits

    m_prev = m_sc[...]
    m_new = jnp.maximum(m_prev, jnp.max(logits, axis=-1, keepdims=True))
    l_sc[...] = l_sc[...] * jnp.exp(m_prev - m_new) + jnp.sum(
        jnp.exp(logits - m_new), axis=-1, keepdims=True)
    m_sc[...] = m_new

    @pl.when(v == pl.num_programs(1) - 1)
    def _():
        lse_ref[...] = m_sc[...] + jnp.log(l_sc[...])


def _normalize_kernel(logits_ref, lse_ref, o_ref):
    o_ref[...] = (logits_ref[...] - lse_ref[...]).astype(o_ref.dtype)


# --------------------------------------------------------------------------------------
# pallas_call wrappers
# --------------------------------------------------------------------------------------
@functools.partial(jax.jit, static_argnames=("tile_n", "out_dtype", "compute_dtype"))
def _forward_fused(x2, weight, bias, *, tile_n, out_dtype, compute_dtype):
    N, H = x2.shape
    V = weight.shape[0]
    N_pad = _round_up(N, tile_n)
    if N_pad != N:
        x2 = jnp.pad(x2, ((0, N_pad - N), (0, 0)))

    xc = x2.astype(compute_dtype)
    wc = weight.astype(compute_dtype)
    b2 = bias.astype(jnp.float32).reshape(1, V)

    cbytes = np.dtype(compute_dtype).itemsize
    obytes = np.dtype(out_dtype).itemsize
    grid_n = N_pad // tile_n

    vmem_est = (V * H * cbytes                # resident weight
                + 2 * tile_n * H * cbytes     # double-buffered X tiles
                + 2 * tile_n * V * obytes     # double-buffered out tiles
                + 2 * tile_n * V * 4          # f32 logits temporaries
                + 2 * V * 4)                  # bias
    cost = pl.CostEstimate(
        flops=2 * N_pad * H * V,
        transcendentals=N_pad * V,
        bytes_accessed=(N_pad * H * cbytes + V * H * cbytes + V * 4
                        + N_pad * V * obytes),
    )

    out = pl.pallas_call(
        _fused_decoder_kernel,
        out_shape=jax.ShapeDtypeStruct((N_pad, V), out_dtype),
        grid_spec=pltpu.PrefetchScalarGridSpec(
            num_scalar_prefetch=0,
            grid=(grid_n,),
            in_specs=[
                pl.BlockSpec((tile_n, H), lambda i: (i, 0)),   # X row tile (streamed)
                pl.BlockSpec((V, H), lambda i: (0, 0)),        # full weight (resident)
                pl.BlockSpec((1, V), lambda i: (0, 0)),        # bias (resident)
            ],
            out_specs=pl.BlockSpec((tile_n, V), lambda i: (i, 0)),
        ),
        compiler_params=pltpu.CompilerParams(
            dimension_semantics=("parallel",),
            vmem_limit_bytes=_vmem_limit(vmem_est),
        ),
        cost_estimate=cost,
    )(xc, wc, b2)
    return out[:N]


@functools.partial(jax.jit,
                   static_argnames=("tile_n", "tile_v", "out_dtype", "compute_dtype"))
def _forward_vocab_tiled(x2, weight, bias, *, tile_n, tile_v, out_dtype, compute_dtype):
    N, H = x2.shape
    V = weight.shape[0]
    N_pad = _round_up(N, tile_n)
    V_pad = _round_up(V, tile_v)
    if N_pad != N:
        x2 = jnp.pad(x2, ((0, N_pad - N), (0, 0)))
    if V_pad != V:
        weight = jnp.pad(weight, ((0, V_pad - V), (0, 0)))
        bias = jnp.pad(bias, (0, V_pad - V), constant_values=_NEG_BIG)

    xc = x2.astype(compute_dtype)
    wc = weight.astype(compute_dtype)
    b2 = bias.astype(jnp.float32).reshape(1, V_pad)

    cbytes = np.dtype(compute_dtype).itemsize
    obytes = np.dtype(out_dtype).itemsize
    grid_n = N_pad // tile_n
    grid_v = V_pad // tile_v

    # ---- pass 1: logits (f32) + online per-row logsumexp -------------------------------
    vmem_est1 = (2 * tile_n * H * cbytes + 2 * tile_v * H * cbytes
                 + 4 * tile_n * tile_v * 4 + 2 * tile_v * 4 + 4 * tile_n * 4)
    cost1 = pl.CostEstimate(
        flops=2 * N_pad * H * V_pad,
        transcendentals=N_pad * V_pad,
        bytes_accessed=(grid_n * V_pad * H * cbytes + N_pad * H * cbytes
                        + N_pad * V_pad * 4 + N_pad * 4 + V_pad * 4),
    )
    logits, lse = pl.pallas_call(
        _logits_stats_kernel,
        out_shape=(jax.ShapeDtypeStruct((N_pad, V_pad), jnp.float32),
                   jax.ShapeDtypeStruct((N_pad, 1), jnp.float32)),
        grid_spec=pltpu.PrefetchScalarGridSpec(
            num_scalar_prefetch=0,
            grid=(grid_n, grid_v),
            in_specs=[
                pl.BlockSpec((tile_n, H), lambda n, v: (n, 0)),    # X tile (resident over V)
                pl.BlockSpec((tile_v, H), lambda n, v: (v, 0)),    # weight V-slab (streamed)
                pl.BlockSpec((1, tile_v), lambda n, v: (0, v)),    # bias V-slab
            ],
            out_specs=(
                pl.BlockSpec((tile_n, tile_v), lambda n, v: (n, v)),  # raw logits
                pl.BlockSpec((tile_n, 1), lambda n, v: (n, 0)),       # per-row lse
            ),
            scratch_shapes=[pltpu.VMEM((tile_n, 1), jnp.float32),     # running max
                            pltpu.VMEM((tile_n, 1), jnp.float32)],    # running sum-exp
        ),
        compiler_params=pltpu.CompilerParams(
            dimension_semantics=("parallel", "arbitrary"),
            vmem_limit_bytes=_vmem_limit(vmem_est1),
        ),
        cost_estimate=cost1,
    )(xc, wc, b2)

    # ---- pass 2: cheap elementwise normalize: out = logits - lse -----------------------
    # Use the widest lane-dense V tile that fits VMEM (fewer grid steps, unmasked vst).
    tile_v2 = _norm_tile_v(V_pad, tile_v, tile_n, obytes)
    grid_v2 = V_pad // tile_v2
    vmem_est2 = 2 * tile_n * tile_v2 * (4 + obytes) + 4 * tile_n * 4
    cost2 = pl.CostEstimate(
        flops=N_pad * V_pad,
        transcendentals=0,
        bytes_accessed=N_pad * V_pad * (4 + obytes) + N_pad * 4,
    )
    out = pl.pallas_call(
        _normalize_kernel,
        out_shape=jax.ShapeDtypeStruct((N_pad, V_pad), out_dtype),
        grid_spec=pltpu.PrefetchScalarGridSpec(
            num_scalar_prefetch=0,
            grid=(grid_n, grid_v2),
            in_specs=[
                pl.BlockSpec((tile_n, tile_v2), lambda n, v: (n, v)),
                pl.BlockSpec((tile_n, 1), lambda n, v: (n, 0)),
            ],
            out_specs=pl.BlockSpec((tile_n, tile_v2), lambda n, v: (n, v)),
        ),
        compiler_params=pltpu.CompilerParams(
            dimension_semantics=("parallel", "parallel"),
            vmem_limit_bytes=_vmem_limit(vmem_est2),
        ),
        cost_estimate=cost2,
    )(logits, lse)
    return out[:N, :V]


def full_softmax_decoder_forward(x, weight, bias, *, tile_n=None, tile_v=512,
                                 compute_dtype=None, out_dtype=jnp.float32,
                                 vocab_tiled=None):
    """Pallas equivalent of CustomLossFullSoftmaxDecoder.forward.

    x:      (..., H)   activations
    weight: (V, H)     torch.nn.Linear convention (out_features, in_features)
    bias:   (V,)
    returns (..., V)   log-probabilities (f32 by default for a clean loss)
    """
    lead = x.shape[:-1]
    H = x.shape[-1]
    V = weight.shape[0]
    x2 = x.reshape(-1, H)
    N = x2.shape[0]

    cdt = np.dtype(compute_dtype if compute_dtype is not None else x.dtype)
    odt = np.dtype(out_dtype)
    pack = _sublane_pack(cdt)

    if tile_n is None:
        tile_n = max(pack, min(256, _round_up(N, pack)))   # big M tile, sublane-aligned
    else:
        tile_n = max(pack, _round_up(int(tile_n), pack))
    tile_v = max(128, _round_up(min(int(tile_v), _round_up(V, 128)), 128))

    if vocab_tiled is None:
        cbytes, obytes = cdt.itemsize, odt.itemsize
        fused_est = (V * H * cbytes + 2 * tile_n * H * cbytes
                     + 2 * tile_n * V * obytes + 2 * tile_n * V * 4 + 2 * V * 4)
        vocab_tiled = fused_est > int(0.7 * _tpu_vmem_bytes())

    if vocab_tiled:
        out = _forward_vocab_tiled(x2, weight, bias, tile_n=tile_n, tile_v=tile_v,
                                   out_dtype=odt, compute_dtype=cdt)
    else:
        out = _forward_fused(x2, weight, bias, tile_n=tile_n,
                             out_dtype=odt, compute_dtype=cdt)
    return out.reshape(*lead, V)


# --------------------------------------------------------------------------------------
# plain-JAX reference + loss glue (mirrors the PyTorch module; cheap, not kernel-worthy)
# --------------------------------------------------------------------------------------
def reference_forward(x, weight, bias):
    a = jnp.einsum("...h,vh->...v", x, weight) + bias
    return jax.nn.log_softmax(a, axis=-1)


def plain_nll_loss(log_preds, targets):
    return -jnp.take_along_axis(log_preds, targets[:, None], axis=1)[:, 0]


def label_smoothed_nll_loss(log_preds, targets, eps):
    n_class = log_preds.shape[1]
    one_hot = jax.nn.one_hot(targets, n_class, dtype=log_preds.dtype)
    smooth = one_hot * (1.0 - eps) + (1.0 - one_hot) * eps / n_class
    return -(smooth * log_preds).sum(axis=1)


def neg_log_prob(log_preds_flat, targets_flat, label_smoothing=None):
    if label_smoothing is None:
        losses = plain_nll_loss(log_preds_flat, targets_flat)
    else:
        losses = label_smoothed_nll_loss(log_preds_flat, targets_flat, label_smoothing)
    return losses.sum(), targets_flat.size


# --------------------------------------------------------------------------------------
if __name__ == "__main__":
    key = jax.random.PRNGKey(0)
    k_x, k_w, k_t = jax.random.split(key, 3)

    # small shapes consistent with the module: (batch, seq, hidden) -> (batch, seq, vocab)
    batch, seq, nb_hidden, nb_output = 2, 8, 32, 256
    init_range = 0.1

    x = jax.random.normal(k_x, (batch, seq, nb_hidden), dtype=jnp.float32)
    weight = jax.random.uniform(
        k_w, (nb_output, nb_hidden), minval=-init_range, maxval=init_range,
        dtype=jnp.float32)
    bias = jnp.zeros((nb_output,), dtype=jnp.float32)
    targets = jax.random.randint(k_t, (batch, seq), 0, nb_output, dtype=jnp.int32)

    ref = reference_forward(x, weight, bias)

    # 1) fused single-pass path (weight VMEM-resident), f32 compute
    out_fused = jax.block_until_ready(full_softmax_decoder_forward(x, weight, bias))
    assert out_fused.shape == (batch, seq, nb_output)
    assert jnp.max(jnp.abs(out_fused - ref)) < 1e-4

    # 2) vocab-tiled two-pass path (what large-V / v7x shapes auto-select), forced here
    out_tiled = jax.block_until_ready(
        full_softmax_decoder_forward(x, weight, bias, vocab_tiled=True, tile_v=128))
    assert out_tiled.shape == (batch, seq, nb_output)
    assert jnp.max(jnp.abs(out_tiled - ref)) < 1e-4

    # 3) bf16-compute fused path (MXU-native inputs, f32 accumulate)
    out_bf16 = jax.block_until_ready(
        full_softmax_decoder_forward(x, weight, bias, compute_dtype=jnp.bfloat16))
    assert jnp.max(jnp.abs(out_bf16 - ref)) < 5e-2

    # loss glue on top of the kernel output (plain NLL and label-smoothed variants)
    total, count = neg_log_prob(out_fused.reshape(-1, nb_output), targets.reshape(-1))
    jax.block_until_ready(total)
    assert count == batch * seq
    total_ls, _ = neg_log_prob(out_fused.reshape(-1, nb_output),
                               targets.reshape(-1), label_smoothing=0.1)
    jax.block_until_ready(total_ls)

    print("KERNEL_OK")
</pallas_src>

<mosaic_0001>
module attributes {stable_mosaic.version = 11 : i64} {
  func.func @_fused_decoder_kernel(%arg0: i32, %arg1: memref<16x32xf32, #tpu.memory_space<vmem>>, %arg2: memref<256x32xf32, #tpu.memory_space<vmem>>, %arg3: memref<1x256xf32, #tpu.memory_space<vmem>>, %arg4: memref<16x256xf32, #tpu.memory_space<vmem>>) attributes {dimension_semantics = [#tpu.dimension_semantics<parallel>], iteration_bounds = array<i64: 1>, scalar_prefetch = 0 : i64, scratch_operands = 0 : i64, tpu.core_type = #tpu.core_type<tc>, window_params = [{transform_indices = @transform_0, window_bounds = array<i64: 16, 32>}, {pipeline_mode = #tpu.pipeline_mode<synchronous>, transform_indices = @transform_1, window_bounds = array<i64: 256, 32>}, {pipeline_mode = #tpu.pipeline_mode<synchronous>, transform_indices = @transform_2, window_bounds = array<i64: 1, 256>}, {transform_indices = @transform_3, window_bounds = array<i64: 16, 256>}]} {
    %c0 = arith.constant 0 : index
    %c0_0 = arith.constant 0 : index
    %0 = vector.load %arg1[%c0, %c0_0] : memref<16x32xf32, #tpu.memory_space<vmem>>, vector<16x32xf32>
    %c0_1 = arith.constant 0 : index
    %c0_2 = arith.constant 0 : index
    %1 = vector.load %arg2[%c0_1, %c0_2] : memref<256x32xf32, #tpu.memory_space<vmem>>, vector<256x32xf32>
    %cst = arith.constant dense<0.000000e+00> : vector<16x256xf32>
    %2 = tpu.matmul %0, %1, %cst {dimension_numbers = #tpu.dot_dimension_numbers<[1], [1], [0], [0], [0, 0, 1, 0], [], []>} : vector<16x32xf32>, vector<256x32xf32>, vector<16x256xf32> -> vector<16x256xf32>
    %c0_3 = arith.constant 0 : index
    %c0_4 = arith.constant 0 : index
    %3 = vector.load %arg3[%c0_3, %c0_4] : memref<1x256xf32, #tpu.memory_space<vmem>>, vector<1x256xf32>
    %4 = vector.broadcast %3 : vector<1x256xf32> to vector<16x256xf32>
    %5 = arith.addf %2, %4 : vector<16x256xf32>
    %cst_5 = arith.constant dense<0xFF800000> : vector<16xf32>
    %6 = vector.multi_reduction <maximumf>, %5, %cst_5 [1] : vector<16x256xf32> to vector<16xf32>
    %7 = vector.shape_cast %6 : vector<16xf32> to vector<16x1xf32>
    %8 = vector.broadcast %7 : vector<16x1xf32> to vector<16x256xf32>
    %9 = arith.subf %5, %8 : vector<16x256xf32>
    %10 = math.exp %9 : vector<16x256xf32>
    %cst_6 = arith.constant dense<0.000000e+00> : vector<16xf32>
    %11 = vector.multi_reduction <add>, %10, %cst_6 [1] : vector<16x256xf32> to vector<16xf32>
    %12 = vector.shape_cast %11 : vector<16xf32> to vector<16x1xf32>
    %13 = math.log %12 : vector<16x1xf32>
    %14 = vector.broadcast %13 : vector<16x1xf32> to vector<16x256xf32>
    %15 = arith.subf %9, %14 : vector<16x256xf32>
    %c0_7 = arith.constant 0 : index
    %c0_8 = arith.constant 0 : index
    %16 = vector.load %arg4[%c0_7, %c0_8] : memref<16x256xf32, #tpu.memory_space<vmem>>, vector<16x256xf32>
    tpu.vector_store %arg4[%c0_7, %c0_8], %15 {strides = array<i32>} : memref<16x256xf32, #tpu.memory_space<vmem>>, vector<16x256xf32>,
    return
  }
  func.func @transform_0(%arg0: i32) -> (i32, i32) {
    %c0_i32 = arith.constant 0 : i32
    %c0_i32_0 = arith.constant 0 : i32
    return %arg0, %c0_i32 : i32, i32
  }
  func.func @transform_1(%arg0: i32) -> (i32, i32) {
    %c0_i32 = arith.constant 0 : i32
    %c0_i32_0 = arith.constant 0 : i32
    %c0_i32_1 = arith.constant 0 : i32
    return %c0_i32, %c0_i32_0 : i32, i32
  }
  func.func @transform_2(%arg0: i32) -> (i32, i32) {
    %c0_i32 = arith.constant 0 : i32
    %c0_i32_0 = arith.constant 0 : i32
    %c0_i32_1 = arith.constant 0 : i32
    return %c0_i32, %c0_i32_0 : i32, i32
  }
  func.func @transform_3(%arg0: i32) -> (i32, i32) {
    %c0_i32 = arith.constant 0 : i32
    %c0_i32_0 = arith.constant 0 : i32
    return %arg0, %c0_i32 : i32, i32
  }
}

</mosaic_0001>

<llo_original>
// kernel: _forward_fused.1
$region0: #{_forward_fused.1}
  #allocation0 [shape = 'u32[]', space=smem, size = 0x4, offset = 0x4, fixed_abs, tag = 'smem constant byte address 0x4 - core index']
  #allocation1 [shape = 'u32[144,128]{1,0:T(1,128)}', space=vmem, size = 0x12000, scoped, tag = 'internal scratch']
  %s0 = inlined_call_operand.vmem [shape: f32[16,32], index: 0, kind: input, shape index: {}]
  %s1 = inlined_call_operand.vmem [shape: f32[256,32], index: 1, kind: input, shape index: {}]
  %s2 = inlined_call_operand.vmem [shape: f32[1,256], index: 2, kind: input, shape index: {}]
  %s3 = inlined_call_operand.hbm [shape: f32[16,256], index: 3, kind: output, shape index: {}]
  %s4 = sld [smem:[#allocation0]]
  $region22: #{_forward_fused.1} parent=0
    _
  %s6 = ssub.s32 1, %s4
  %s7 = scalar_select 0, %s6, %s4
  $region1: #{_forward_fused.1} parent=0
    #allocation2 [shape = 'u8[16384]{0}', space=vmem, size = 0x4000, scoped, tag = 'output window, operand 0, single buffered']
    #allocation3 [shape = 's32[1]{0}', space=sflag, size = 0x4, scoped, tag = 'scoped memory for _forward_fused.1']
    %8 = vsyncpa [#allocation3], 0
    // Predicated region
    $region2: #{_forward_fused.1} parent=1 // pred_check
      _
    $region3: #{_forward_fused.1} parent=1 // pred_check_branch
      %10 = sbr.rel (0) target = $region5
    $region4: #{_forward_fused.1} parent=1 // pred_region
      _
    $region5: #{_forward_fused.1} parent=1 // pred_fallthru
      _
    // Predicated region
    $region6: #{_forward_fused.1} parent=1 // pred_check
      _
    $region7: #{_forward_fused.1} parent=1 // pred_check_branch
      %12 = sbr.rel (0) target = $region9
    $region8: #{_forward_fused.1} parent=1 // pred_region
      _
    $region9: #{_forward_fused.1} parent=1 // pred_fallthru
      _
    // Predicated region
    $region10: #{_forward_fused.1} parent=1 // pred_check
      _
    $region11: #{_forward_fused.1} parent=1 // pred_check_branch
      %14 = sbr.rel (0) target = $region13
    $region12: #{_forward_fused.1} parent=1 // pred_region
      _
    $region13: #{_forward_fused.1} parent=1 // pred_fallthru
      _
    %v15 = vld [vmem:[%s0] sm:$0xff]
    %v16 = vld [vmem:[%s0 + $0x8] sm:$0xff]
    %v17 = vld [vmem:[%s1] sm:$0xff]
    %v18 = vld [vmem:[%s1 + $0x8] sm:$0xff]
    %v19 = vld [vmem:[%s1 + $0x10] sm:$0xff]
    %v20 = vld [vmem:[%s1 + $0x18] sm:$0xff]
    %v21 = vld [vmem:[%s1 + $0x20] sm:$0xff]
    %v22 = vld [vmem:[%s1 + $0x28] sm:$0xff]
    %v23 = vld [vmem:[%s1 + $0x30] sm:$0xff]
    %v24 = vld [vmem:[%s1 + $0x38] sm:$0xff]
    %v25 = vld [vmem:[%s1 + $0x40] sm:$0xff]
    %v26 = vld [vmem:[%s1 + $0x48] sm:$0xff]
    %v27 = vld [vmem:[%s1 + $0x50] sm:$0xff]
    %v28 = vld [vmem:[%s1 + $0x58] sm:$0xff]
    %v29 = vld [vmem:[%s1 + $0x60] sm:$0xff]
    %v30 = vld [vmem:[%s1 + $0x68] sm:$0xff]
    %v31 = vld [vmem:[%s1 + $0x70] sm:$0xff]
    %v32 = vld [vmem:[%s1 + $0x78] sm:$0xff]
    %v33 = vld [vmem:[%s1 + $0x80] sm:$0xff]
    %v34 = vld [vmem:[%s1 + $0x88] sm:$0xff]
    %v35 = vld [vmem:[%s1 + $0x90] sm:$0xff]
    %v36 = vld [vmem:[%s1 + $0x98] sm:$0xff]
    %v37 = vld [vmem:[%s1 + $0xa0] sm:$0xff]
    %v38 = vld [vmem:[%s1 + $0xa8] sm:$0xff]
    %v39 = vld [vmem:[%s1 + $0xb0] sm:$0xff]
    %v40 = vld [vmem:[%s1 + $0xb8] sm:$0xff]
    %v41 = vld [vmem:[%s1 + $0xc0] sm:$0xff]
    %v42 = vld [vmem:[%s1 + $0xc8] sm:$0xff]
    %v43 = vld [vmem:[%s1 + $0xd0] sm:$0xff]
    %v44 = vld [vmem:[%s1 + $0xd8] sm:$0xff]
    %v45 = vld [vmem:[%s1 + $0xe0] sm:$0xff]
    %v46 = vld [vmem:[%s1 + $0xe8] sm:$0xff]
    %v47 = vld [vmem:[%s1 + $0xf0] sm:$0xff]
    %v48 = vld [vmem:[%s1 + $0xf8] sm:$0xff]
    %v49 = vld [vmem:[%s2] sm:$0x3]
    %v51 = vlaneseq
    %v52 = vshrl.u32 %v51, 7
    %v53 = vsub.s32 0, %v52
    %v54 = vrot.slane %v49, %v53
    %v55 = vlaneseq
    %v56 = vshrl.u32 %v55, 7
    %v57 = vsub.s32 1, %v56
    %v58 = vrot.slane %v49, %v57
    %vm61 = vcmask 261120
    %v63 = vsel %vm61, %v15, 0
    %v66 = vsel %vm61, %v16, 0
    %v69 = vsel %vm61, %v17, 0
    %v72 = vsel %vm61, %v18, 0
    %v75 = vsel %vm61, %v19, 0
    %v78 = vsel %vm61, %v20, 0
    %v81 = vsel %vm61, %v21, 0
    %v84 = vsel %vm61, %v22, 0
    %v87 = vsel %vm61, %v23, 0
    %v90 = vsel %vm61, %v24, 0
    %v93 = vsel %vm61, %v25, 0
    %v96 = vsel %vm61, %v26, 0
    %v99 = vsel %vm61, %v27, 0
    %v102 = vsel %vm61, %v28, 0
    %v105 = vsel %vm61, %v29, 0
    %v108 = vsel %vm61, %v30, 0
    %v111 = vsel %vm61, %v31, 0
    %v114 = vsel %vm61, %v32, 0
    %v117 = vsel %vm61, %v33, 0
    %v120 = vsel %vm61, %v34, 0
    %v123 = vsel %vm61, %v35, 0
    %v126 = vsel %vm61, %v36, 0
    %v129 = vsel %vm61, %v37, 0
    %v132 = vsel %vm61, %v38, 0
    %v135 = vsel %vm61, %v39, 0
    %v138 = vsel %vm61, %v40, 0
    %v141 = vsel %vm61, %v41, 0
    %v144 = vsel %vm61, %v42, 0
    %v147 = vsel %vm61, %v43, 0
    %v150 = vsel %vm61, %v44, 0
    %v153 = vsel %vm61, %v45, 0
    %v156 = vsel %vm61, %v46, 0
    %v159 = vsel %vm61, %v47, 0
    %v162 = vsel %vm61, %v48, 0
    %164 = vmatprep.subr.mxu0 0.0
    %165 = vmatpush1.xpose.msra.mxu0 %v69
    %166 = vmatprep.subr.mxu0 0.0
    %167 = vmatpush1.xpose.msra.mxu0 %v72
    %168 = vmatprep.subr.mxu0 0.0
    %169 = vmatpush1.xpose.msra.mxu0 %v75
    %170 = vmatprep.subr.mxu0 0.0
    %171 = vmatpush1.xpose.msra.mxu0 %v78
    %172 = vmatprep.subr.mxu0 0.0
    %173 = vmatpush1.xpose.msra.mxu0 %v81
    %174 = vmatprep.subr.mxu0 0.0
    %175 = vmatpush1.xpose.msra.mxu0 %v84
    %176 = vmatprep.subr.mxu0 0.0
    %177 = vmatpush1.xpose.msra.mxu0 %v87
    %178 = vmatprep.subr.mxu0 0.0
    %179 = vmatpush1.xpose.msra.mxu0 %v90
    %180 = vmatprep.subr.mxu0 0.0
    %181 = vmatpush1.xpose.msra.mxu0 %v93
    %182 = vmatprep.subr.mxu0 0.0
    %183 = vmatpush1.xpose.msra.mxu0 %v96
    %184 = vmatprep.subr.mxu0 0.0
    %185 = vmatpush1.xpose.msra.mxu0 %v99
    %186 = vmatprep.subr.mxu0 0.0
    %187 = vmatpush1.xpose.msra.mxu0 %v102
    %188 = vmatprep.subr.mxu0 0.0
    %189 = vmatpush1.xpose.msra.mxu0 %v105
    %190 = vmatprep.subr.mxu0 0.0
    %191 = vmatpush1.xpose.msra.mxu0 %v108
    %192 = vmatprep.subr.mxu0 0.0
    %193 = vmatpush1.xpose.msra.mxu0 %v111
    %194 = vmatprep.subr.mxu0 0.0
    %195 = vmatpush1.xpose.msra.mxu0 %v114
    %196 = vmatprep.subr.mxu0 0.0
    %197 = vmatpush1.xpose.msra.mxu0 %v117
    %198 = vmatprep.subr.mxu0 0.0
    %199 = vmatpush1.xpose.msra.mxu0 %v120
    %200 = vmatprep.subr.mxu0 0.0
    %201 = vmatpush1.xpose.msra.mxu0 %v123
    %202 = vmatprep.subr.mxu0 0.0
    %203 = vmatpush1.xpose.msra.mxu0 %v126
    %204 = vmatprep.subr.mxu0 0.0
    %205 = vmatpush1.xpose.msra.mxu0 %v129
    %206 = vmatprep.subr.mxu0 0.0
    %207 = vmatpush1.xpose.msra.mxu0 %v132
    %208 = vmatprep.subr.mxu0 0.0
    %209 = vmatpush1.xpose.msra.mxu0 %v135
    %210 = vmatprep.subr.mxu0 0.0
    %211 = vmatpush1.xpose.msra.mxu0 %v138
    %212 = vmatprep.subr.mxu0 0.0
    %213 = vmatpush1.xpose.msra.mxu0 %v141
    %214 = vmatprep.subr.mxu0 0.0
    %215 = vmatpush1.xpose.msra.mxu0 %v144
    %216 = vmatprep.subr.mxu0 0.0
    %217 = vmatpush1.xpose.msra.mxu0 %v147
    %218 = vmatprep.subr.mxu0 0.0
    %219 = vmatpush1.xpose.msra.mxu0 %v150
    %220 = vmatprep.subr.mxu0 0.0
    %221 = vmatpush1.xpose.msra.mxu0 %v153
    %222 = vmatprep.subr.mxu0 0.0
    %223 = vmatpush1.xpose.msra.mxu0 %v156
    %224 = vmatprep.subr.mxu0 0.0
    %225 = vmatpush1.xpose.msra.mxu0 %v159
    %226 = vmatprep.subr.mxu0 0.0
    %227 = vmatpush1.xpose.msra.mxu0 %v162
    %228 = vmatprep.mubr.f32.mxu0 0.0
    %229 = vmatmul.mubr.f32.gmra.mrb[0].mxu0 %v63
    %v230 = vpop.f32.mrb[0].mxu0
    %v231 = vadd.f32 %v54, %v230
    %v232 = vpop.f32.mrb[0].mxu0
    %v233 = vadd.f32 %v58, %v232
    %234 = vmatprep.mubr.f32.mxu0 0.0
    %235 = vmatmul.mubr.f32.gmra.mrb[0].mxu0 %v66
    %v236 = vpop.f32.mrb[0].mxu0
    %v237 = vadd.f32 %v54, %v236
    %v238 = vpop.f32.mrb[0].mxu0
    %v239 = vadd.f32 %v58, %v238
    %240 = vdwg.mxu0
    %v241 = vmax.f32 %v231, %v233
    %242 = vmax.xlane.f32.xlu0 %v241
    %v243 = vpop.xlane.xlu0 %242
    %v244 = vmax.f32 %v237, %v239
    %245 = vmax.xlane.f32.xlu0 %v244
    %v246 = vpop.xlane.xlu0 %245
    %v247 = vsub.f32 %v231, %v243
    %v248 = vsub.f32 %v233, %v243
    %v249 = vsub.f32 %v237, %v246
    %v250 = vsub.f32 %v239, %v246
    %v251 = vmul.f32 %v247, 1.442695
    %v252 = vpow.pop %v251
    %v253 = vmul.f32 %v248, 1.442695
    %v254 = vpow.pop %v253
    %v255 = vmul.f32 %v249, 1.442695
    %v256 = vpow.pop %v255
    %v257 = vmul.f32 %v250, 1.442695
    %v258 = vpow.pop %v257
    %v259 = vadd.f32 %v252, %v254
    %260 = vadd.xlane.f32.xlu0 %v259
    %v261 = vpop.xlane.xlu0 %260
    %v262 = vadd.f32 %v256, %v258
    %263 = vadd.xlane.f32.xlu0 %v262
    %v264 = vpop.xlane.xlu0 %263
    %v265 = vlog2.pop %v261
    %v266 = vmul.f32 %v265, 0.6931472
    %v267 = vlog2.pop %v264
    %v268 = vmul.f32 %v267, 0.6931472
    %v269 = vsub.f32 %v247, %v266
    %v270 = vsub.f32 %v248, %v266
    %v271 = vsub.f32 %v249, %v268
    %v272 = vsub.f32 %v250, %v268
    %273 = vst [vmem:[#allocation2] sm:$0xff] %v269
    %274 = vst [vmem:[#allocation2 + $0x8] sm:$0xff] %v270
    %275 = vst [vmem:[#allocation2 + $0x10] sm:$0xff] %v271
    %276 = vst [vmem:[#allocation2 + $0x18] sm:$0xff] %v272
    // Predicated region
    $region14: #{_forward_fused.1} parent=1 // pred_check
      _
    $region15: #{_forward_fused.1} parent=1 // pred_check_branch
      %278 = sbr.rel (0) target = $region17
    $region16: #{_forward_fused.1} parent=1 // pred_region
      %s280 = ssub.s32 512, 512
      %281 = vsyncadd [#allocation3], %s280
      %s282 = sshll.u32 [#allocation2], 4
      %s283 = int_to_ptr.vmem [resolvable:$true] %s282
      %288 = dma.vmem_to_hbm [thread:$0]  %s283, 512, %s3, [#allocation3], 256, 256, 16
    $region17: #{_forward_fused.1} parent=1 // pred_fallthru
      _
    // Predicated region
    $region18: #{_forward_fused.1} parent=1 // pred_check
      _
    $region19: #{_forward_fused.1} parent=1 // pred_check_branch
      %290 = sbr.rel (0) target = $region21
    $region20: #{_forward_fused.1} parent=1 // pred_region
      %291 = dma.done [#allocation3], 512
    $region21: #{_forward_fused.1} parent=1 // pred_fallthru
      _
    %292 = vsyncpa [#allocation3], 1

</llo_original>
